<compile_context>
chip_gen: v6e
topology: v6e:2x2x1
jax: 0.10.0
libtpu: 0.0.40
codegen_flags: <defaults>
</compile_context>

<pallas_src>
import jax
import jax.numpy as jnp
from jax.experimental import pallas as pl
from jax.experimental.pallas import tpu as pltpu

IN_DIM = 768
HID_DIM = 128
OUT_DIM = 1


def mlp_kernel(x_ref, w1_ref, b1_ref, w2_ref, b2_ref, o_ref):
    # x_ref : (tb, 768)  VMEM bf16 (streamed)   w1_ref: (768, 128) VMEM bf16 (resident)
    # b1_ref: (1, 128)   VMEM f32               w2_ref: (1, 128)   VMEM f32 (layer-2 row)
    # b2_ref: (1, 1)     SMEM f32 (scalar)      o_ref : (tb, 1)    VMEM f32
    h = jnp.dot(x_ref[...], w1_ref[...], preferred_element_type=jnp.float32)  # MXU, f32 acc
    h = jnp.maximum(h + b1_ref[...], 0.0)                                     # bias + ReLU (VPU)
    # N=1 second layer stays off the MXU: VPU multiply + cross-lane sum against
    # the (1, 128) w2 row; keepdims keeps the result in the sublane-major column
    # layout the (tb, 1) output block wants -> no per-tile relayout.
    y = jnp.sum(h * w2_ref[...], axis=-1, keepdims=True) + b2_ref[0, 0]       # (tb, 1)
    o_ref[...] = y.astype(o_ref.dtype)


def _round_up(n, m):
    return ((n + m - 1) // m) * m


def mlp_forward(x, w1, b1, w2_row, b2, *, tb=2048):
    """y = relu(x @ w1 + b1) @ w2_row.T + b2;  x: (B, 768) -> (B, 1) float32."""
    B = x.shape[0]

    # Clamp the batch tile: lane/sublane aligned, no larger than needed for small
    # batches, and guaranteeing >= 2 grid steps once B >= 256 (v7x megacore).
    tb = max(128, min(tb, _round_up(B, 128)))
    if B >= 256:
        tb = min(tb, _round_up(B, 256) // 2)
    num_tiles = pl.cdiv(B, tb)

    # Stream the big operands in bf16; accumulation is f32 inside the kernel.
    x_bf16 = x.astype(jnp.bfloat16)
    w1_bf16 = w1.astype(jnp.bfloat16)

    out = pl.pallas_call(
        mlp_kernel,
        out_shape=jax.ShapeDtypeStruct((B, OUT_DIM), jnp.float32),
        grid_spec=pltpu.PrefetchScalarGridSpec(
            num_scalar_prefetch=0,
            grid=(num_tiles,),
            in_specs=[
                pl.BlockSpec((tb, IN_DIM), lambda i: (i, 0)),          # x tile (streamed, bf16)
                pl.BlockSpec((IN_DIM, HID_DIM), lambda i: (0, 0)),     # W1 (resident, bf16)
                pl.BlockSpec((1, HID_DIM), lambda i: (0, 0)),          # b1 (f32)
                pl.BlockSpec((1, HID_DIM), lambda i: (0, 0)),          # w2 as a row (f32)
                pl.BlockSpec(memory_space=pltpu.MemorySpace.SMEM),     # b2 scalar in SMEM
            ],
            out_specs=pl.BlockSpec((tb, OUT_DIM), lambda i: (i, 0)),   # (tb, 1) column
        ),
        compiler_params=pltpu.CompilerParams(
            dimension_semantics=("parallel",),        # shard batch tiles across TCs (v7x)
            vmem_limit_bytes=32 * 1024 * 1024),       # headroom for large tiles on v5e
    )(x_bf16, w1_bf16,
      b1.astype(jnp.float32), w2_row.astype(jnp.float32), b2.astype(jnp.float32))

    return out


def init_params(key):
    # Deterministic init mimicking PyTorch's default Linear init
    # (uniform(-1/sqrt(fan_in), 1/sqrt(fan_in))).  Weights stored so the kernel
    # computes y = x @ W1 + b1 directly; w2 is kept as its (1, 128) row.
    k1, k2, k3, k4 = jax.random.split(key, 4)
    bnd1 = 1.0 / jnp.sqrt(IN_DIM)
    bnd2 = 1.0 / jnp.sqrt(HID_DIM)
    w1 = jax.random.uniform(k1, (IN_DIM, HID_DIM), jnp.float32, -bnd1, bnd1)
    b1 = jax.random.uniform(k2, (1, HID_DIM), jnp.float32, -bnd1, bnd1)
    w2_row = jax.random.uniform(k3, (1, HID_DIM), jnp.float32, -bnd2, bnd2)
    b2 = jax.random.uniform(k4, (1, 1), jnp.float32, -bnd2, bnd2)
    return w1, b1, w2_row, b2


if __name__ == "__main__":
    key = jax.random.PRNGKey(0)
    kx, kx2, kp = jax.random.split(key, 3)

    w1, b1, w2_row, b2 = init_params(kp)

    # Small demo batch (wrapper clamps tile; single partial block).
    batch = 16
    x = jax.random.normal(kx, (batch, IN_DIM), jnp.float32)
    out = jax.block_until_ready(mlp_forward(x, w1, b1, w2_row, b2))
    ref = jnp.maximum(x @ w1 + b1, 0.0) @ w2_row.T + b2
    assert out.shape == (batch, OUT_DIM)
    assert jnp.allclose(out, ref, atol=2e-2, rtol=2e-2), "mismatch vs reference (B=16)"

    # Ragged batch: exercises the multi-step grid and the masked edge block
    # (no wrapper-side padding of x).
    batch2 = 300
    x2 = jax.random.normal(kx2, (batch2, IN_DIM), jnp.float32)
    out2 = jax.block_until_ready(mlp_forward(x2, w1, b1, w2_row, b2))
    ref2 = jnp.maximum(x2 @ w1 + b1, 0.0) @ w2_row.T + b2
    assert out2.shape == (batch2, OUT_DIM)
    assert jnp.allclose(out2, ref2, atol=2e-2, rtol=2e-2), "mismatch vs reference (B=300)"

    print("KERNEL_OK")
</pallas_src>

<mosaic_0001>
module attributes {stable_mosaic.version = 11 : i64} {
  func.func @mlp_kernel(%arg0: i32, %arg1: memref<128x768xbf16, #tpu.memory_space<vmem>>, %arg2: memref<768x128xbf16, #tpu.memory_space<vmem>>, %arg3: memref<1x128xf32, #tpu.memory_space<vmem>>, %arg4: memref<1x128xf32, #tpu.memory_space<vmem>>, %arg5: memref<1x1xf32, #tpu.memory_space<smem>>, %arg6: memref<128x1xf32, #tpu.memory_space<vmem>>) attributes {dimension_semantics = [#tpu.dimension_semantics<parallel>], iteration_bounds = array<i64: 1>, scalar_prefetch = 0 : i64, scratch_operands = 0 : i64, tpu.core_type = #tpu.core_type<tc>, window_params = [{transform_indices = @transform_0, window_bounds = array<i64: 128, 768>}, {pipeline_mode = #tpu.pipeline_mode<synchronous>, transform_indices = @transform_1, window_bounds = array<i64: 768, 128>}, {pipeline_mode = #tpu.pipeline_mode<synchronous>, transform_indices = @transform_2, window_bounds = array<i64: 1, 128>}, {pipeline_mode = #tpu.pipeline_mode<synchronous>, transform_indices = @transform_3, window_bounds = array<i64: 1, 128>}, {transform_indices = @transform_4, window_bounds = array<i64: 1, 1>}, {transform_indices = @transform_5, window_bounds = array<i64: 128, 1>}]} {
    %c0 = arith.constant 0 : index
    %c0_0 = arith.constant 0 : index
    %0 = vector.load %arg1[%c0, %c0_0] : memref<128x768xbf16, #tpu.memory_space<vmem>>, vector<128x768xbf16>
    %c0_1 = arith.constant 0 : index
    %c0_2 = arith.constant 0 : index
    %1 = vector.load %arg2[%c0_1, %c0_2] : memref<768x128xbf16, #tpu.memory_space<vmem>>, vector<768x128xbf16>
    %cst = arith.constant dense<0.000000e+00> : vector<128x128xf32>
    %2 = tpu.matmul %0, %1, %cst {dimension_numbers = #tpu.dot_dimension_numbers<[1], [0], [0], [1], [0, 0, 1, 1], [], []>} : vector<128x768xbf16>, vector<768x128xbf16>, vector<128x128xf32> -> vector<128x128xf32>
    %c0_3 = arith.constant 0 : index
    %c0_4 = arith.constant 0 : index
    %3 = vector.load %arg3[%c0_3, %c0_4] : memref<1x128xf32, #tpu.memory_space<vmem>>, vector<1x128xf32>
    %4 = vector.broadcast %3 : vector<1x128xf32> to vector<128x128xf32>
    %5 = arith.addf %2, %4 : vector<128x128xf32>
    %cst_5 = arith.constant 0.000000e+00 : f32
    %6 = vector.broadcast %cst_5 : f32 to vector<128x128xf32>
    %7 = arith.maximumf %5, %6 : vector<128x128xf32>
    %c0_6 = arith.constant 0 : index
    %c0_7 = arith.constant 0 : index
    %8 = vector.load %arg4[%c0_6, %c0_7] : memref<1x128xf32, #tpu.memory_space<vmem>>, vector<1x128xf32>
    %9 = vector.broadcast %8 : vector<1x128xf32> to vector<128x128xf32>
    %10 = arith.mulf %7, %9 : vector<128x128xf32>
    %cst_8 = arith.constant dense<0.000000e+00> : vector<128xf32>
    %11 = vector.multi_reduction <add>, %10, %cst_8 [1] : vector<128x128xf32> to vector<128xf32>
    %12 = vector.shape_cast %11 : vector<128xf32> to vector<128x1xf32>
    %c0_9 = arith.constant 0 : index
    %c0_10 = arith.constant 0 : index
    %13 = memref.load %arg5[%c0_9, %c0_10] : memref<1x1xf32, #tpu.memory_space<smem>>
    %14 = vector.broadcast %13 : f32 to vector<128x1xf32>
    %15 = arith.addf %12, %14 : vector<128x1xf32>
    %c0_11 = arith.constant 0 : index
    %c0_12 = arith.constant 0 : index
    %16 = vector.load %arg6[%c0_11, %c0_12] : memref<128x1xf32, #tpu.memory_space<vmem>>, vector<128x1xf32>
    tpu.vector_store %arg6[%c0_11, %c0_12], %15 {strides = array<i32>} : memref<128x1xf32, #tpu.memory_space<vmem>>, vector<128x1xf32>,
    return
  }
  func.func @transform_0(%arg0: i32) -> (i32, i32) {
    %c0_i32 = arith.constant 0 : i32
    %c0_i32_0 = arith.constant 0 : i32
    return %arg0, %c0_i32 : i32, i32
  }
  func.func @transform_1(%arg0: i32) -> (i32, i32) {
    %c0_i32 = arith.constant 0 : i32
    %c0_i32_0 = arith.constant 0 : i32
    %c0_i32_1 = arith.constant 0 : i32
    return %c0_i32, %c0_i32_0 : i32, i32
  }
  func.func @transform_2(%arg0: i32) -> (i32, i32) {
    %c0_i32 = arith.constant 0 : i32
    %c0_i32_0 = arith.constant 0 : i32
    %c0_i32_1 = arith.constant 0 : i32
    return %c0_i32, %c0_i32_0 : i32, i32
  }
  func.func @transform_3(%arg0: i32) -> (i32, i32) {
    %c0_i32 = arith.constant 0 : i32
    %c0_i32_0 = arith.constant 0 : i32
    %c0_i32_1 = arith.constant 0 : i32
    return %c0_i32, %c0_i32_0 : i32, i32
  }
  func.func @transform_4(%arg0: i32) -> (i32, i32) {
    %c0_i32 = arith.constant 0 : i32
    %c0_i32_0 = arith.constant 0 : i32
    %c0_i32_1 = arith.constant 0 : i32
    return %c0_i32, %c0_i32_0 : i32, i32
  }
  func.func @transform_5(%arg0: i32) -> (i32, i32) {
    %c0_i32 = arith.constant 0 : i32
    %c0_i32_0 = arith.constant 0 : i32
    return %arg0, %c0_i32 : i32, i32
  }
}

</mosaic_0001>

<llo_original>
// kernel: tpu_custom_call.1
$region0: #{tpu_custom_call.1}
  #allocation0 [shape = 'u32[]', space=smem, size = 0x4, offset = 0x4, fixed_abs, tag = 'smem constant byte address 0x4 - core index']
  #allocation1 [shape = 'u32[144,128]{1,0:T(1,128)}', space=vmem, size = 0x12000, scoped, tag = 'internal scratch']
  #allocation2 [shape = 'f32[1,1]{1,0:T(1,128)S(6)}', space=smem, size = 0x200, scoped, tag = 'scoped memory for tpu_custom_call.1']
  %s0 = inlined_call_operand.hbm [shape: bf16[16,768], index: 0, kind: input, shape index: {}]
  %s1 = inlined_call_operand.hbm [shape: bf16[768,128], index: 1, kind: input, shape index: {}]
  %s2 = inlined_call_operand.vmem [shape: f32[1,128], index: 2, kind: input, shape index: {}]
  %s3 = inlined_call_operand.vmem [shape: f32[1,128], index: 3, kind: input, shape index: {}]
  %s4 = inlined_call_operand.<no memory space> [shape: f32[1,1], index: 4, kind: input, shape index: {}]
  %s5 = inlined_call_operand.vmem [shape: f32[16,1], index: 5, kind: output, shape index: {}]
  %s6 = sld [smem:[#allocation0]]
  $region72: #{tpu_custom_call.1} parent=0
    _
  %s8 = ssub.s32 1, %s6
  %s9 = scalar_select 0, %s8, %s6
  %10 = sst [smem:[#allocation2]] %s4
  $region1: #{tpu_custom_call.1} parent=0
    #allocation3 [shape = 'u8[196608]{0}', space=vmem, size = 0x30000, scoped, tag = 'input window, operand 0, single buffered']
    #allocation4 [shape = 's32[1]{0}', space=sflag, size = 0x4, scoped, tag = 'scoped memory for tpu_custom_call.1']
    #allocation5 [shape = 'u8[196608]{0}', space=vmem, size = 0x30000, scoped, tag = 'input window, operand 1, single buffered']
    #allocation6 [shape = 's32[1]{0}', space=sflag, size = 0x4, scoped, tag = 'scoped memory for tpu_custom_call.1']
    #allocation7 [shape = 'u8[65536]{0}', space=vmem, size = 0x10000, scoped, tag = 'output window, operand 0, single buffered']
    %11 = vsyncpa [#allocation4], 0
    %12 = vsyncpa [#allocation6], 0
    // Predicated region
    $region2: #{tpu_custom_call.1} parent=1 // pred_check
      _
    $region3: #{tpu_custom_call.1} parent=1 // pred_check_branch
      %14 = sbr.rel (0) target = $region5
    $region4: #{tpu_custom_call.1} parent=1 // pred_region
      %s16 = ssub.s32 6144, 768
      %17 = vsyncadd [#allocation4], %s16
      %s18 = sshll.u32 [#allocation3], 4
      %s19 = int_to_ptr.vmem [resolvable:$true] %s18
      %24 = dma.hbm_to_vmem [thread:$0]  %s0, 768, %s19, [#allocation4], 384, 384, 24
    $region5: #{tpu_custom_call.1} parent=1 // pred_fallthru
      _
    // Predicated region
    $region6: #{tpu_custom_call.1} parent=1 // pred_check
      _
    $region7: #{tpu_custom_call.1} parent=1 // pred_check_branch
      %26 = sbr.rel (0) target = $region9
    $region8: #{tpu_custom_call.1} parent=1 // pred_region
      %s28 = ssub.s32 6144, 6144
      %29 = vsyncadd [#allocation6], %s28
      %s30 = sshll.u32 [#allocation5], 4
      %s31 = int_to_ptr.vmem [resolvable:$true] %s30
      %36 = dma.hbm_to_vmem [thread:$0]  %s1, 6144, %s31, [#allocation6], 64, 64, 4
    $region9: #{tpu_custom_call.1} parent=1 // pred_fallthru
      _
    // Predicated region
    $region10: #{tpu_custom_call.1} parent=1 // pred_check
      _
    $region11: #{tpu_custom_call.1} parent=1 // pred_check_branch
      %38 = sbr.rel (0) target = $region13
    $region12: #{tpu_custom_call.1} parent=1 // pred_region
      _
    $region13: #{tpu_custom_call.1} parent=1 // pred_fallthru
      _
    // Predicated region
    $region14: #{tpu_custom_call.1} parent=1 // pred_check
      _
    $region15: #{tpu_custom_call.1} parent=1 // pred_check_branch
      %40 = sbr.rel (0) target = $region17
    $region16: #{tpu_custom_call.1} parent=1 // pred_region
      _
    $region17: #{tpu_custom_call.1} parent=1 // pred_fallthru
      _
    // Predicated region
    $region18: #{tpu_custom_call.1} parent=1 // pred_check
      _
    $region19: #{tpu_custom_call.1} parent=1 // pred_check_branch
      %42 = sbr.rel (0) target = $region21
    $region20: #{tpu_custom_call.1} parent=1 // pred_region
      _
    $region21: #{tpu_custom_call.1} parent=1 // pred_fallthru
      _
    // Predicated region
    $region22: #{tpu_custom_call.1} parent=1 // pred_check
      _
    $region23: #{tpu_custom_call.1} parent=1 // pred_check_branch
      %44 = sbr.rel (0) target = $region25
    $region24: #{tpu_custom_call.1} parent=1 // pred_region
      %45 = dma.done [#allocation4], 6144
    $region25: #{tpu_custom_call.1} parent=1 // pred_fallthru
      _
    // Predicated region
    $region26: #{tpu_custom_call.1} parent=1 // pred_check
      _
    $region27: #{tpu_custom_call.1} parent=1 // pred_check_branch
      %47 = sbr.rel (0) target = $region29
    $region28: #{tpu_custom_call.1} parent=1 // pred_region
      %48 = dma.done [#allocation6], 6144
    $region29: #{tpu_custom_call.1} parent=1 // pred_fallthru
      _
    %v50 = vld [vmem:[#allocation3] sm:$0xff]
    %v51 = vld [vmem:[#allocation3 + $0x8] sm:$0xff]
    %v52 = vld [vmem:[#allocation3 + $0x10] sm:$0xff]
    %v53 = vld [vmem:[#allocation3 + $0x18] sm:$0xff]
    %v54 = vld [vmem:[#allocation3 + $0x20] sm:$0xff]
    %v55 = vld [vmem:[#allocation3 + $0x28] sm:$0xff]
    %v56 = vld [vmem:[#allocation3 + $0x30] sm:$0xff]
    %v57 = vld [vmem:[#allocation3 + $0x38] sm:$0xff]
    %v58 = vld [vmem:[#allocation3 + $0x40] sm:$0xff]
    %v59 = vld [vmem:[#allocation3 + $0x48] sm:$0xff]
    %v60 = vld [vmem:[#allocation3 + $0x50] sm:$0xff]
    %v61 = vld [vmem:[#allocation3 + $0x58] sm:$0xff]
    %v62 = vld [vmem:[#allocation3 + $0x60] sm:$0xff]
    %v63 = vld [vmem:[#allocation3 + $0x68] sm:$0xff]
    %v64 = vld [vmem:[#allocation3 + $0x70] sm:$0xff]
    %v65 = vld [vmem:[#allocation3 + $0x78] sm:$0xff]
    %v66 = vld [vmem:[#allocation3 + $0x80] sm:$0xff]
    %v67 = vld [vmem:[#allocation3 + $0x88] sm:$0xff]
    %v68 = vld [vmem:[#allocation3 + $0x90] sm:$0xff]
    %v69 = vld [vmem:[#allocation3 + $0x98] sm:$0xff]
    %v70 = vld [vmem:[#allocation3 + $0xa0] sm:$0xff]
    %v71 = vld [vmem:[#allocation3 + $0xa8] sm:$0xff]
    %v72 = vld [vmem:[#allocation3 + $0xb0] sm:$0xff]
    %v73 = vld [vmem:[#allocation3 + $0xb8] sm:$0xff]
    %v74 = vld [vmem:[#allocation3 + $0xc0] sm:$0xff]
    %v75 = vld [vmem:[#allocation3 + $0xc8] sm:$0xff]
    %v76 = vld [vmem:[#allocation3 + $0xd0] sm:$0xff]
    %v77 = vld [vmem:[#allocation3 + $0xd8] sm:$0xff]
    %v78 = vld [vmem:[#allocation3 + $0xe0] sm:$0xff]
    %v79 = vld [vmem:[#allocation3 + $0xe8] sm:$0xff]
    %v80 = vld [vmem:[#allocation3 + $0xf0] sm:$0xff]
    %v81 = vld [vmem:[#allocation3 + $0xf8] sm:$0xff]
    %v82 = vld [vmem:[#allocation3 + $0x100] sm:$0xff]
    %v83 = vld [vmem:[#allocation3 + $0x108] sm:$0xff]
    %v84 = vld [vmem:[#allocation3 + $0x110] sm:$0xff]
    %v85 = vld [vmem:[#allocation3 + $0x118] sm:$0xff]
    %v86 = vld [vmem:[#allocation3 + $0x120] sm:$0xff]
    %v87 = vld [vmem:[#allocation3 + $0x128] sm:$0xff]
    %v88 = vld [vmem:[#allocation3 + $0x130] sm:$0xff]
    %v89 = vld [vmem:[#allocation3 + $0x138] sm:$0xff]
    %v90 = vld [vmem:[#allocation3 + $0x140] sm:$0xff]
    %v91 = vld [vmem:[#allocation3 + $0x148] sm:$0xff]
    %v92 = vld [vmem:[#allocation3 + $0x150] sm:$0xff]
    %v93 = vld [vmem:[#allocation3 + $0x158] sm:$0xff]
    %v94 = vld [vmem:[#allocation3 + $0x160] sm:$0xff]
    %v95 = vld [vmem:[#allocation3 + $0x168] sm:$0xff]
    %v96 = vld [vmem:[#allocation3 + $0x170] sm:$0xff]
    %v97 = vld [vmem:[#allocation3 + $0x178] sm:$0xff]
    %v98 = vld [vmem:[#allocation5] sm:$0xf]
    %v99 = vld [vmem:[#allocation5 + $0x4] sm:$0xf]
    %v100 = vld [vmem:[#allocation5 + $0x8] sm:$0xf]
    %v101 = vld [vmem:[#allocation5 + $0xc] sm:$0xf]
    %v102 = vld [vmem:[#allocation5 + $0x10] sm:$0xf]
    %v103 = vld [vmem:[#allocation5 + $0x14] sm:$0xf]
    %v104 = vld [vmem:[#allocation5 + $0x18] sm:$0xf]
    %v105 = vld [vmem:[#allocation5 + $0x1c] sm:$0xf]
    %v106 = vld [vmem:[#allocation5 + $0x20] sm:$0xf]
    %v107 = vld [vmem:[#allocation5 + $0x24] sm:$0xf]
    %v108 = vld [vmem:[#allocation5 + $0x28] sm:$0xf]
    %v109 = vld [vmem:[#allocation5 + $0x2c] sm:$0xf]
    %v110 = vld [vmem:[#allocation5 + $0x30] sm:$0xf]
    %v111 = vld [vmem:[#allocation5 + $0x34] sm:$0xf]
    %v112 = vld [vmem:[#allocation5 + $0x38] sm:$0xf]
    %v113 = vld [vmem:[#allocation5 + $0x3c] sm:$0xf]
    %v114 = vld [vmem:[#allocation5 + $0x40] sm:$0xf]
    %v115 = vld [vmem:[#allocation5 + $0x44] sm:$0xf]
    %v116 = vld [vmem:[#allocation5 + $0x48] sm:$0xf]
    %v117 = vld [vmem:[#allocation5 + $0x4c] sm:$0xf]
    %v118 = vld [vmem:[#allocation5 + $0x50] sm:$0xf]
    %v119 = vld [vmem:[#allocation5 + $0x54] sm:$0xf]
    %v120 = vld [vmem:[#allocation5 + $0x58] sm:$0xf]
    %v121 = vld [vmem:[#allocation5 + $0x5c] sm:$0xf]
    %v122 = vld [vmem:[#allocation5 + $0x60] sm:$0xf]
    %v123 = vld [vmem:[#allocation5 + $0x64] sm:$0xf]
    %v124 = vld [vmem:[#allocation5 + $0x68] sm:$0xf]
    %v125 = vld [vmem:[#allocation5 + $0x6c] sm:$0xf]
    %v126 = vld [vmem:[#allocation5 + $0x70] sm:$0xf]
    %v127 = vld [vmem:[#allocation5 + $0x74] sm:$0xf]
    %v128 = vld [vmem:[#allocation5 + $0x78] sm:$0xf]
    %v129 = vld [vmem:[#allocation5 + $0x7c] sm:$0xf]
    %v130 = vld [vmem:[#allocation5 + $0x80] sm:$0xf]
    %v131 = vld [vmem:[#allocation5 + $0x84] sm:$0xf]
    %v132 = vld [vmem:[#allocation5 + $0x88] sm:$0xf]
    %v133 = vld [vmem:[#allocation5 + $0x8c] sm:$0xf]
    %v134 = vld [vmem:[#allocation5 + $0x90] sm:$0xf]
    %v135 = vld [vmem:[#allocation5 + $0x94] sm:$0xf]
    %v136 = vld [vmem:[#allocation5 + $0x98] sm:$0xf]
    %v137 = vld [vmem:[#allocation5 + $0x9c] sm:$0xf]
    %v138 = vld [vmem:[#allocation5 + $0xa0] sm:$0xf]
    %v139 = vld [vmem:[#allocation5 + $0xa4] sm:$0xf]
    %v140 = vld [vmem:[#allocation5 + $0xa8] sm:$0xf]
    %v141 = vld [vmem:[#allocation5 + $0xac] sm:$0xf]
    %v142 = vld [vmem:[#allocation5 + $0xb0] sm:$0xf]
    %v143 = vld [vmem:[#allocation5 + $0xb4] sm:$0xf]
    %v144 = vld [vmem:[#allocation5 + $0xb8] sm:$0xf]
    %v145 = vld [vmem:[#allocation5 + $0xbc] sm:$0xf]
    %v146 = vld [vmem:[#allocation5 + $0xc0] sm:$0xf]
    %v147 = vld [vmem:[#allocation5 + $0xc4] sm:$0xf]
    %v148 = vld [vmem:[#allocation5 + $0xc8] sm:$0xf]
    %v149 = vld [vmem:[#allocation5 + $0xcc] sm:$0xf]
    %v150 = vld [vmem:[#allocation5 + $0xd0] sm:$0xf]
    %v151 = vld [vmem:[#allocation5 + $0xd4] sm:$0xf]
    %v152 = vld [vmem:[#allocation5 + $0xd8] sm:$0xf]
    %v153 = vld [vmem:[#allocation5 + $0xdc] sm:$0xf]
    %v154 = vld [vmem:[#allocation5 + $0xe0] sm:$0xf]
    %v155 = vld [vmem:[#allocation5 + $0xe4] sm:$0xf]
    %v156 = vld [vmem:[#allocation5 + $0xe8] sm:$0xf]
    %v157 = vld [vmem:[#allocation5 + $0xec] sm:$0xf]
    %v158 = vld [vmem:[#allocation5 + $0xf0] sm:$0xf]
    %v159 = vld [vmem:[#allocation5 + $0xf4] sm:$0xf]
    %v160 = vld [vmem:[#allocation5 + $0xf8] sm:$0xf]
    %v161 = vld [vmem:[#allocation5 + $0xfc] sm:$0xf]
    %v162 = vld [vmem:[#allocation5 + $0x100] sm:$0xf]
    %v163 = vld [vmem:[#allocation5 + $0x104] sm:$0xf]
    %v164 = vld [vmem:[#allocation5 + $0x108] sm:$0xf]
    %v165 = vld [vmem:[#allocation5 + $0x10c] sm:$0xf]
    %v166 = vld [vmem:[#allocation5 + $0x110] sm:$0xf]
    %v167 = vld [vmem:[#allocation5 + $0x114] sm:$0xf]
    %v168 = vld [vmem:[#allocation5 + $0x118] sm:$0xf]
    %v169 = vld [vmem:[#allocation5 + $0x11c] sm:$0xf]
    %v170 = vld [vmem:[#allocation5 + $0x120] sm:$0xf]
    %v171 = vld [vmem:[#allocation5 + $0x124] sm:$0xf]
    %v172 = vld [vmem:[#allocation5 + $0x128] sm:$0xf]
    %v173 = vld [vmem:[#allocation5 + $0x12c] sm:$0xf]
    %v174 = vld [vmem:[#allocation5 + $0x130] sm:$0xf]
    %v175 = vld [vmem:[#allocation5 + $0x134] sm:$0xf]
    %v176 = vld [vmem:[#allocation5 + $0x138] sm:$0xf]
    %v177 = vld [vmem:[#allocation5 + $0x13c] sm:$0xf]
    %v178 = vld [vmem:[#allocation5 + $0x140] sm:$0xf]
    %v179 = vld [vmem:[#allocation5 + $0x144] sm:$0xf]
    %v180 = vld [vmem:[#allocation5 + $0x148] sm:$0xf]
    %v181 = vld [vmem:[#allocation5 + $0x14c] sm:$0xf]
    %v182 = vld [vmem:[#allocation5 + $0x150] sm:$0xf]
    %v183 = vld [vmem:[#allocation5 + $0x154] sm:$0xf]
    %v184 = vld [vmem:[#allocation5 + $0x158] sm:$0xf]
    %v185 = vld [vmem:[#allocation5 + $0x15c] sm:$0xf]
    %v186 = vld [vmem:[#allocation5 + $0x160] sm:$0xf]
    %v187 = vld [vmem:[#allocation5 + $0x164] sm:$0xf]
    %v188 = vld [vmem:[#allocation5 + $0x168] sm:$0xf]
    %v189 = vld [vmem:[#allocation5 + $0x16c] sm:$0xf]
    %v190 = vld [vmem:[#allocation5 + $0x170] sm:$0xf]
    %v191 = vld [vmem:[#allocation5 + $0x174] sm:$0xf]
    %v192 = vld [vmem:[#allocation5 + $0x178] sm:$0xf]
    %v193 = vld [vmem:[#allocation5 + $0x17c] sm:$0xf]
    %v194 = vld [vmem:[%s2] sm:$0x1]
    %v196 = vlaneseq
    %v197 = vshrl.u32 %v196, 7
    %v198 = vsub.s32 0, %v197
    %v199 = vrot.slane %v194, %v198
    %v249 = vunpack.c.l.b16 %v50
    %v250 = vunpack.c.h.b16 %v50
    %v251 = vunpack.c.l.b16 %v51
    %v252 = vunpack.c.h.b16 %v51
    %v253 = vunpack.c.l.b16 %v52
    %v254 = vunpack.c.h.b16 %v52
    %v255 = vunpack.c.l.b16 %v53
    %v256 = vunpack.c.h.b16 %v53
    %v257 = vunpack.c.l.b16 %v54
    %v258 = vunpack.c.h.b16 %v54
    %v259 = vunpack.c.l.b16 %v55
    %v260 = vunpack.c.h.b16 %v55
    %v261 = vunpack.c.l.b16 %v56
    %v262 = vunpack.c.h.b16 %v56
    %v263 = vunpack.c.l.b16 %v57
    %v264 = vunpack.c.h.b16 %v57
    %v265 = vunpack.c.l.b16 %v58
    %v266 = vunpack.c.h.b16 %v58
    %v267 = vunpack.c.l.b16 %v59
    %v268 = vunpack.c.h.b16 %v59
    %v269 = vunpack.c.l.b16 %v60
    %v270 = vunpack.c.h.b16 %v60
    %v271 = vunpack.c.l.b16 %v61
    %v272 = vunpack.c.h.b16 %v61
    %v273 = vunpack.c.l.b16 %v62
    %v274 = vunpack.c.h.b16 %v62
    %v275 = vunpack.c.l.b16 %v63
    %v276 = vunpack.c.h.b16 %v63
    %v277 = vunpack.c.l.b16 %v64
    %v278 = vunpack.c.h.b16 %v64
    %v279 = vunpack.c.l.b16 %v65
    %v280 = vunpack.c.h.b16 %v65
    %v281 = vunpack.c.l.b16 %v66
    %v282 = vunpack.c.h.b16 %v66
    %v283 = vunpack.c.l.b16 %v67
    %v284 = vunpack.c.h.b16 %v67
    %v285 = vunpack.c.l.b16 %v68
    %v286 = vunpack.c.h.b16 %v68
    %v287 = vunpack.c.l.b16 %v69
    %v288 = vunpack.c.h.b16 %v69
    %v289 = vunpack.c.l.b16 %v70
    %v290 = vunpack.c.h.b16 %v70
    %v291 = vunpack.c.l.b16 %v71
    %v292 = vunpack.c.h.b16 %v71
    %v293 = vunpack.c.l.b16 %v72
    %v294 = vunpack.c.h.b16 %v72
    %v295 = vunpack.c.l.b16 %v73
    %v296 = vunpack.c.h.b16 %v73
    %v297 = vunpack.c.l.b16 %v74
    %v298 = vunpack.c.h.b16 %v74
    %v299 = vunpack.c.l.b16 %v75
    %v300 = vunpack.c.h.b16 %v75
    %v301 = vunpack.c.l.b16 %v76
    %v302 = vunpack.c.h.b16 %v76
    %v303 = vunpack.c.l.b16 %v77
    %v304 = vunpack.c.h.b16 %v77
    %v305 = vunpack.c.l.b16 %v78
    %v306 = vunpack.c.h.b16 %v78
    %v307 = vunpack.c.l.b16 %v79
    %v308 = vunpack.c.h.b16 %v79
    %v309 = vunpack.c.l.b16 %v80
    %v310 = vunpack.c.h.b16 %v80
    %v311 = vunpack.c.l.b16 %v81
    %v312 = vunpack.c.h.b16 %v81
    %v313 = vunpack.c.l.b16 %v82
    %v314 = vunpack.c.h.b16 %v82
    %v315 = vunpack.c.l.b16 %v83
    %v316 = vunpack.c.h.b16 %v83
    %v317 = vunpack.c.l.b16 %v84
    %v318 = vunpack.c.h.b16 %v84
    %v319 = vunpack.c.l.b16 %v85
    %v320 = vunpack.c.h.b16 %v85
    %v321 = vunpack.c.l.b16 %v86
    %v322 = vunpack.c.h.b16 %v86
    %v323 = vunpack.c.l.b16 %v87
    %v324 = vunpack.c.h.b16 %v87
    %v325 = vunpack.c.l.b16 %v88
    %v326 = vunpack.c.h.b16 %v88
    %v327 = vunpack.c.l.b16 %v89
    %v328 = vunpack.c.h.b16 %v89
    %v329 = vunpack.c.l.b16 %v90
    %v330 = vunpack.c.h.b16 %v90
    %v331 = vunpack.c.l.b16 %v91
    %v332 = vunpack.c.h.b16 %v91
    %v333 = vunpack.c.l.b16 %v92
    %v334 = vunpack.c.h.b16 %v92
    %v335 = vunpack.c.l.b16 %v93
    %v336 = vunpack.c.h.b16 %v93
    %v337 = vunpack.c.l.b16 %v94
    %v338 = vunpack.c.h.b16 %v94
    %v339 = vunpack.c.l.b16 %v95
    %v340 = vunpack.c.h.b16 %v95
    %v341 = vunpack.c.l.b16 %v96
    %v342 = vunpack.c.h.b16 %v96
    %v343 = vunpack.c.l.b16 %v97
    %v344 = vunpack.c.h.b16 %v97
    %v345 = vpack.c.b16 %v255, %v249
    %v346 = vpack.c.b16 %v256, %v250
    %v347 = vpack.c.b16 %v257, %v251
    %v348 = vpack.c.b16 %v258, %v252
    %v349 = vpack.c.b16 %v259, %v253
    %v350 = vpack.c.b16 %v260, %v254
    %v351 = vpack.c.b16 %v267, %v261
    %v352 = vpack.c.b16 %v268, %v262
    %v353 = vpack.c.b16 %v269, %v263
    %v354 = vpack.c.b16 %v270, %v264
    %v355 = vpack.c.b16 %v271, %v265
    %v356 = vpack.c.b16 %v272, %v266
    %v357 = vpack.c.b16 %v279, %v273
    %v358 = vpack.c.b16 %v280, %v274
    %v359 = vpack.c.b16 %v281, %v275
    %v360 = vpack.c.b16 %v282, %v276
    %v361 = vpack.c.b16 %v283, %v277
    %v362 = vpack.c.b16 %v284, %v278
    %v363 = vpack.c.b16 %v291, %v285
    %v364 = vpack.c.b16 %v292, %v286
    %v365 = vpack.c.b16 %v293, %v287
    %v366 = vpack.c.b16 %v294, %v288
    %v367 = vpack.c.b16 %v295, %v289
    %v368 = vpack.c.b16 %v296, %v290
    %v369 = vpack.c.b16 %v303, %v297
    %v370 = vpack.c.b16 %v304, %v298
    %v371 = vpack.c.b16 %v305, %v299
    %v372 = vpack.c.b16 %v306, %v300
    %v373 = vpack.c.b16 %v307, %v301
    %v374 = vpack.c.b16 %v308, %v302
    %v375 = vpack.c.b16 %v315, %v309
    %v376 = vpack.c.b16 %v316, %v310
    %v377 = vpack.c.b16 %v317, %v311
    %v378 = vpack.c.b16 %v318, %v312
    %v379 = vpack.c.b16 %v319, %v313
    %v380 = vpack.c.b16 %v320, %v314
    %v381 = vpack.c.b16 %v327, %v321
    %v382 = vpack.c.b16 %v328, %v322
    %v383 = vpack.c.b16 %v329, %v323
    %v384 = vpack.c.b16 %v330, %v324
    %v385 = vpack.c.b16 %v331, %v325
    %v386 = vpack.c.b16 %v332, %v326
    %v387 = vpack.c.b16 %v339, %v333
    %v388 = vpack.c.b16 %v340, %v334
    %v389 = vpack.c.b16 %v341, %v335
    %v390 = vpack.c.b16 %v342, %v336
    %v391 = vpack.c.b16 %v343, %v337
    %v392 = vpack.c.b16 %v344, %v338
    %v537 = vunpack.c.l.b16 %v98
    %v538 = vunpack.c.l.b16 %v99
    %v539 = vunpack.c.l.b16 %v100
    %v540 = vunpack.c.l.b16 %v101
    %v541 = vunpack.c.l.b16 %v102
    %v542 = vunpack.c.l.b16 %v103
    %v543 = vunpack.c.l.b16 %v104
    %v544 = vunpack.c.l.b16 %v105
    %v545 = vunpack.c.l.b16 %v106
    %v546 = vunpack.c.l.b16 %v107
    %v547 = vunpack.c.l.b16 %v108
    %v548 = vunpack.c.l.b16 %v109
    %v549 = vunpack.c.l.b16 %v110
    %v550 = vunpack.c.l.b16 %v111
    %v551 = vunpack.c.l.b16 %v112
    %v552 = vunpack.c.l.b16 %v113
    %v553 = vunpack.c.l.b16 %v114
    %v554 = vunpack.c.l.b16 %v115
    %v555 = vunpack.c.l.b16 %v116
    %v556 = vunpack.c.l.b16 %v117
    %v557 = vunpack.c.l.b16 %v118
    %v558 = vunpack.c.l.b16 %v119
    %v559 = vunpack.c.l.b16 %v120
    %v560 = vunpack.c.l.b16 %v121
    %v561 = vunpack.c.l.b16 %v122
    %v562 = vunpack.c.l.b16 %v123
    %v563 = vunpack.c.l.b16 %v124
    %v564 = vunpack.c.l.b16 %v125
    %v565 = vunpack.c.l.b16 %v126
    %v566 = vunpack.c.l.b16 %v127
    %v567 = vunpack.c.l.b16 %v128
    %v568 = vunpack.c.l.b16 %v129
    %v569 = vunpack.c.l.b16 %v130
    %v570 = vunpack.c.l.b16 %v131
    %v571 = vunpack.c.l.b16 %v132
    %v572 = vunpack.c.l.b16 %v133
    %v573 = vunpack.c.l.b16 %v134
    %v574 = vunpack.c.l.b16 %v135
    %v575 = vunpack.c.l.b16 %v136
    %v576 = vunpack.c.l.b16 %v137
    %v577 = vunpack.c.l.b16 %v138
    %v578 = vunpack.c.l.b16 %v139
    %v579 = vunpack.c.l.b16 %v140
    %v580 = vunpack.c.l.b16 %v141
    %v581 = vunpack.c.l.b16 %v142
    %v582 = vunpack.c.l.b16 %v143
    %v583 = vunpack.c.l.b16 %v144
    %v584 = vunpack.c.l.b16 %v145
    %v585 = vunpack.c.l.b16 %v146
    %v586 = vunpack.c.l.b16 %v147
    %v587 = vunpack.c.l.b16 %v148
    %v588 = vunpack.c.l.b16 %v149
    %v589 = vunpack.c.l.b16 %v150
    %v590 = vunpack.c.l.b16 %v151
    %v591 = vunpack.c.l.b16 %v152
    %v592 = vunpack.c.l.b16 %v153
    %v593 = vunpack.c.l.b16 %v154
    %v594 = vunpack.c.l.b16 %v155
    %v595 = vunpack.c.l.b16 %v156
    %v596 = vunpack.c.l.b16 %v157
    %v597 = vunpack.c.l.b16 %v158
    %v598 = vunpack.c.l.b16 %v159
    %v599 = vunpack.c.l.b16 %v160
    %v600 = vunpack.c.l.b16 %v161
    %v601 = vunpack.c.l.b16 %v162
    %v602 = vunpack.c.l.b16 %v163
    %v603 = vunpack.c.l.b16 %v164
    %v604 = vunpack.c.l.b16 %v165
    %v605 = vunpack.c.l.b16 %v166
    %v606 = vunpack.c.l.b16 %v167
    %v607 = vunpack.c.l.b16 %v168
    %v608 = vunpack.c.l.b16 %v169
    %v609 = vunpack.c.l.b16 %v170
    %v610 = vunpack.c.l.b16 %v171
    %v611 = vunpack.c.l.b16 %v172
    %v612 = vunpack.c.l.b16 %v173
    %v613 = vunpack.c.l.b16 %v174
    %v614 = vunpack.c.l.b16 %v175
    %v615 = vunpack.c.l.b16 %v176
    %v616 = vunpack.c.l.b16 %v177
    %v617 = vunpack.c.l.b16 %v178
    %v618 = vunpack.c.l.b16 %v179
    %v619 = vunpack.c.l.b16 %v180
    %v620 = vunpack.c.l.b16 %v181
    %v621 = vunpack.c.l.b16 %v182
    %v622 = vunpack.c.l.b16 %v183
    %v623 = vunpack.c.l.b16 %v184
    %v624 = vunpack.c.l.b16 %v185
    %v625 = vunpack.c.l.b16 %v186
    %v626 = vunpack.c.l.b16 %v187
    %v627 = vunpack.c.l.b16 %v188
    %v628 = vunpack.c.l.b16 %v189
    %v629 = vunpack.c.l.b16 %v190
    %v630 = vunpack.c.l.b16 %v191
    %v631 = vunpack.c.l.b16 %v192
    %v632 = vunpack.c.l.b16 %v193
    %v633 = vpack.c.b16 %v538, %v537
    %v634 = vpack.c.b16 %v540, %v539
    %v635 = vpack.c.b16 %v542, %v541
    %v636 = vpack.c.b16 %v544, %v543
    %v637 = vpack.c.b16 %v546, %v545
    %v638 = vpack.c.b16 %v548, %v547
    %v639 = vpack.c.b16 %v550, %v549
    %v640 = vpack.c.b16 %v552, %v551
    %v641 = vpack.c.b16 %v554, %v553
    %v642 = vpack.c.b16 %v556, %v555
    %v643 = vpack.c.b16 %v558, %v557
    %v644 = vpack.c.b16 %v560, %v559
    %v645 = vpack.c.b16 %v562, %v561
    %v646 = vpack.c.b16 %v564, %v563
    %v647 = vpack.c.b16 %v566, %v565
    %v648 = vpack.c.b16 %v568, %v567
    %v649 = vpack.c.b16 %v570, %v569
    %v650 = vpack.c.b16 %v572, %v571
    %v651 = vpack.c.b16 %v574, %v573
    %v652 = vpack.c.b16 %v576, %v575
    %v653 = vpack.c.b16 %v578, %v577
    %v654 = vpack.c.b16 %v580, %v579
    %v655 = vpack.c.b16 %v582, %v581
    %v656 = vpack.c.b16 %v584, %v583
    %v657 = vpack.c.b16 %v586, %v585
    %v658 = vpack.c.b16 %v588, %v587
    %v659 = vpack.c.b16 %v590, %v589
    %v660 = vpack.c.b16 %v592, %v591
    %v661 = vpack.c.b16 %v594, %v593
    %v662 = vpack.c.b16 %v596, %v595
    %v663 = vpack.c.b16 %v598, %v597
    %v664 = vpack.c.b16 %v600, %v599
    %v665 = vpack.c.b16 %v602, %v601
    %v666 = vpack.c.b16 %v604, %v603
    %v667 = vpack.c.b16 %v606, %v605
    %v668 = vpack.c.b16 %v608, %v607
    %v669 = vpack.c.b16 %v610, %v609
    %v670 = vpack.c.b16 %v612, %v611
    %v671 = vpack.c.b16 %v614, %v613
    %v672 = vpack.c.b16 %v616, %v615
    %v673 = vpack.c.b16 %v618, %v617
    %v674 = vpack.c.b16 %v620, %v619
    %v675 = vpack.c.b16 %v622, %v621
    %v676 = vpack.c.b16 %v624, %v623
    %v677 = vpack.c.b16 %v626, %v625
    %v678 = vpack.c.b16 %v628, %v627
    %v679 = vpack.c.b16 %v630, %v629
    %v680 = vpack.c.b16 %v632, %v631
    %729 = vmatprep.subr.bf16.mxu0 0
    %730 = vmatpush1.bf16.msra.mxu0 %v640
    %731 = vmatprep.subr.bf16.mxu0 0
    %732 = vmatpush1.bf16.msra.mxu0 %v639
    %733 = vmatprep.subr.bf16.mxu0 0
    %734 = vmatpush1.bf16.msra.mxu0 %v638
    %735 = vmatprep.subr.bf16.mxu0 0
    %736 = vmatpush1.bf16.msra.mxu0 %v637
    %737 = vmatprep.subr.bf16.mxu0 0
    %738 = vmatpush1.bf16.msra.mxu0 %v636
    %739 = vmatprep.subr.bf16.mxu0 0
    %740 = vmatpush1.bf16.msra.mxu0 %v635
    %741 = vmatprep.subr.bf16.mxu0 0
    %742 = vmatpush1.bf16.msra.mxu0 %v634
    %743 = vmatprep.subr.bf16.mxu0 0
    %744 = vmatpush1.bf16.msra.mxu0 %v633
    %745 = vmatprep.subr.bf16.mxu0 0
    %746 = vmatpush2.bf16.msra.mxu0 %v648
    %747 = vmatprep.subr.bf16.mxu0 0
    %748 = vmatpush2.bf16.msra.mxu0 %v647
    %749 = vmatprep.subr.bf16.mxu0 0
    %750 = vmatpush2.bf16.msra.mxu0 %v646
    %751 = vmatprep.subr.bf16.mxu0 0
    %752 = vmatpush2.bf16.msra.mxu0 %v645
    %753 = vmatprep.subr.bf16.mxu0 0
    %754 = vmatpush2.bf16.msra.mxu0 %v644
    %755 = vmatprep.subr.bf16.mxu0 0
    %756 = vmatpush2.bf16.msra.mxu0 %v643
    %757 = vmatprep.subr.bf16.mxu0 0
    %758 = vmatpush2.bf16.msra.mxu0 %v642
    %759 = vmatprep.subr.bf16.mxu0 0
    %760 = vmatpush2.bf16.msra.mxu0 %v641
    %761 = vmatprep.mubr.bf16.mxu0 %v346
    %762 = vmatmul.mubr.bf16.gmra.mxu0 %v345
    %v763 = vpop.f32.mrf.mxu0
    %v764 = vadd.f32 %v199, %v763
    %v765 = vpop.f32.mrf.mxu0
    %v766 = vpop.f32.mrf.mxu0
    %v767 = vadd.f32 %v199, %v766
    %v768 = vpop.f32.mrf.mxu0
    %769 = vmatprep.mubr.bf16.mxu0 %v352
    %770 = vmatmul.mubr.bf16.gmra.mxu0 %v351
    %v771 = vpop.f32.mrf.mxu0
    %v772 = vadd.f32 %v199, %v771
    %v773 = vpop.f32.mrf.mxu0
    %v774 = vpop.f32.mrf.mxu0
    %v775 = vadd.f32 %v199, %v774
    %v776 = vpop.f32.mrf.mxu0
    %777 = vmatprep.mubr.bf16.mxu0 %v358
    %778 = vmatmul.mubr.bf16.gmra.mxu0 %v357
    %v779 = vpop.f32.mrf.mxu0
    %v780 = vadd.f32 %v199, %v779
    %v781 = vpop.f32.mrf.mxu0
    %v782 = vpop.f32.mrf.mxu0
    %v783 = vadd.f32 %v199, %v782
    %v784 = vpop.f32.mrf.mxu0
    %785 = vmatprep.mubr.bf16.mxu0 %v364
    %786 = vmatmul.mubr.bf16.gmra.mxu0 %v363
    %v787 = vpop.f32.mrf.mxu0
    %v788 = vadd.f32 %v199, %v787
    %v789 = vpop.f32.mrf.mxu0
    %v790 = vpop.f32.mrf.mxu0
    %v791 = vadd.f32 %v199, %v790
    %v792 = vpop.f32.mrf.mxu0
    %793 = vmatprep.mubr.bf16.mxu0 %v370
    %794 = vmatmul.mubr.bf16.gmra.mxu0 %v369
    %v795 = vpop.f32.mrf.mxu0
    %v796 = vadd.f32 %v199, %v795
    %v797 = vpop.f32.mrf.mxu0
    %v798 = vpop.f32.mrf.mxu0
    %v799 = vadd.f32 %v199, %v798
    %v800 = vpop.f32.mrf.mxu0
    %801 = vmatprep.mubr.bf16.mxu0 %v376
    %802 = vmatmul.mubr.bf16.gmra.mxu0 %v375
    %v803 = vpop.f32.mrf.mxu0
    %v804 = vadd.f32 %v199, %v803
    %v805 = vpop.f32.mrf.mxu0
    %v806 = vpop.f32.mrf.mxu0
    %v807 = vadd.f32 %v199, %v806
    %v808 = vpop.f32.mrf.mxu0
    %809 = vmatprep.mubr.bf16.mxu0 %v382
    %810 = vmatmul.mubr.bf16.gmra.mxu0 %v381
    %v811 = vpop.f32.mrf.mxu0
    %v812 = vadd.f32 %v199, %v811
    %v813 = vpop.f32.mrf.mxu0
    %v814 = vpop.f32.mrf.mxu0
    %v815 = vadd.f32 %v199, %v814
    %v816 = vpop.f32.mrf.mxu0
    %817 = vmatprep.mubr.bf16.mxu0 %v388
    %818 = vmatmul.mubr.bf16.gmra.mxu0 %v387
    %v819 = vpop.f32.mrf.mxu0
    %v820 = vadd.f32 %v199, %v819
    %v821 = vpop.f32.mrf.mxu0
    %v822 = vpop.f32.mrf.mxu0
    %v823 = vadd.f32 %v199, %v822
    %v824 = vpop.f32.mrf.mxu0
    %825 = vdwg.mxu0
    %826 = vmatprep.subr.bf16.mxu0 0
    %827 = vmatpush1.bf16.msra.mxu0 %v656
    %828 = vmatprep.subr.bf16.mxu0 0
    %829 = vmatpush1.bf16.msra.mxu0 %v655
    %830 = vmatprep.subr.bf16.mxu0 0
    %831 = vmatpush1.bf16.msra.mxu0 %v654
    %832 = vmatprep.subr.bf16.mxu0 0
    %833 = vmatpush1.bf16.msra.mxu0 %v653
    %834 = vmatprep.subr.bf16.mxu0 0
    %835 = vmatpush1.bf16.msra.mxu0 %v652
    %836 = vmatprep.subr.bf16.mxu0 0
    %837 = vmatpush1.bf16.msra.mxu0 %v651
    %838 = vmatprep.subr.bf16.mxu0 0
    %839 = vmatpush1.bf16.msra.mxu0 %v650
    %840 = vmatprep.subr.bf16.mxu0 0
    %841 = vmatpush1.bf16.msra.mxu0 %v649
    %842 = vmatprep.subr.bf16.mxu0 0
    %843 = vmatpush2.bf16.msra.mxu0 %v664
    %844 = vmatprep.subr.bf16.mxu0 0
    %845 = vmatpush2.bf16.msra.mxu0 %v663
    %846 = vmatprep.subr.bf16.mxu0 0
    %847 = vmatpush2.bf16.msra.mxu0 %v662
    %848 = vmatprep.subr.bf16.mxu0 0
    %849 = vmatpush2.bf16.msra.mxu0 %v661
    %850 = vmatprep.subr.bf16.mxu0 0
    %851 = vmatpush2.bf16.msra.mxu0 %v660
    %852 = vmatprep.subr.bf16.mxu0 0
    %853 = vmatpush2.bf16.msra.mxu0 %v659
    %854 = vmatprep.subr.bf16.mxu0 0
    %855 = vmatpush2.bf16.msra.mxu0 %v658
    %856 = vmatprep.subr.bf16.mxu0 0
    %857 = vmatpush2.bf16.msra.mxu0 %v657
    %858 = vmatprep.mubr.bf16.mxu0 %v348
    %859 = vmatmul.mubr.bf16.gmra.mxu0 %v347
    %v860 = vpop.f32.mrf.mxu0
    %v861 = vadd.f32 %v764, %v860
    %v862 = vpop.f32.mrf.mxu0
    %v863 = vpop.f32.mrf.mxu0
    %v864 = vadd.f32 %v767, %v863
    %v865 = vpop.f32.mrf.mxu0
    %866 = vmatprep.mubr.bf16.mxu0 %v354
    %867 = vmatmul.mubr.bf16.gmra.mxu0 %v353
    %v868 = vpop.f32.mrf.mxu0
    %v869 = vadd.f32 %v772, %v868
    %v870 = vpop.f32.mrf.mxu0
    %v871 = vpop.f32.mrf.mxu0
    %v872 = vadd.f32 %v775, %v871
    %v873 = vpop.f32.mrf.mxu0
    %874 = vmatprep.mubr.bf16.mxu0 %v360
    %875 = vmatmul.mubr.bf16.gmra.mxu0 %v359
    %v876 = vpop.f32.mrf.mxu0
    %v877 = vadd.f32 %v780, %v876
    %v878 = vpop.f32.mrf.mxu0
    %v879 = vpop.f32.mrf.mxu0
    %v880 = vadd.f32 %v783, %v879
    %v881 = vpop.f32.mrf.mxu0
    %882 = vmatprep.mubr.bf16.mxu0 %v366
    %883 = vmatmul.mubr.bf16.gmra.mxu0 %v365
    %v884 = vpop.f32.mrf.mxu0
    %v885 = vadd.f32 %v788, %v884
    %v886 = vpop.f32.mrf.mxu0
    %v887 = vpop.f32.mrf.mxu0
    %v888 = vadd.f32 %v791, %v887
    %v889 = vpop.f32.mrf.mxu0
    %890 = vmatprep.mubr.bf16.mxu0 %v372
    %891 = vmatmul.mubr.bf16.gmra.mxu0 %v371
    %v892 = vpop.f32.mrf.mxu0
    %v893 = vadd.f32 %v796, %v892
    %v894 = vpop.f32.mrf.mxu0
    %v895 = vpop.f32.mrf.mxu0
    %v896 = vadd.f32 %v799, %v895
    %v897 = vpop.f32.mrf.mxu0
    %898 = vmatprep.mubr.bf16.mxu0 %v378
    %899 = vmatmul.mubr.bf16.gmra.mxu0 %v377
    %v900 = vpop.f32.mrf.mxu0
    %v901 = vadd.f32 %v804, %v900
    %v902 = vpop.f32.mrf.mxu0
    %v903 = vpop.f32.mrf.mxu0
    %v904 = vadd.f32 %v807, %v903
    %v905 = vpop.f32.mrf.mxu0
    %906 = vmatprep.mubr.bf16.mxu0 %v384
    %907 = vmatmul.mubr.bf16.gmra.mxu0 %v383
    %v908 = vpop.f32.mrf.mxu0
    %v909 = vadd.f32 %v812, %v908
    %v910 = vpop.f32.mrf.mxu0
    %v911 = vpop.f32.mrf.mxu0
    %v912 = vadd.f32 %v815, %v911
    %v913 = vpop.f32.mrf.mxu0
    %914 = vmatprep.mubr.bf16.mxu0 %v390
    %915 = vmatmul.mubr.bf16.gmra.mxu0 %v389
    %v916 = vpop.f32.mrf.mxu0
    %v917 = vadd.f32 %v820, %v916
    %v918 = vpop.f32.mrf.mxu0
    %v919 = vpop.f32.mrf.mxu0
    %v920 = vadd.f32 %v823, %v919
    %v921 = vpop.f32.mrf.mxu0
    %922 = vdwg.mxu0
    %923 = vmatprep.subr.bf16.mxu0 0
    %924 = vmatpush1.bf16.msra.mxu0 %v672
    %925 = vmatprep.subr.bf16.mxu0 0
    %926 = vmatpush1.bf16.msra.mxu0 %v671
    %927 = vmatprep.subr.bf16.mxu0 0
    %928 = vmatpush1.bf16.msra.mxu0 %v670
    %929 = vmatprep.subr.bf16.mxu0 0
    %930 = vmatpush1.bf16.msra.mxu0 %v669
    %931 = vmatprep.subr.bf16.mxu0 0
    %932 = vmatpush1.bf16.msra.mxu0 %v668
    %933 = vmatprep.subr.bf16.mxu0 0
    %934 = vmatpush1.bf16.msra.mxu0 %v667
    %935 = vmatprep.subr.bf16.mxu0 0
    %936 = vmatpush1.bf16.msra.mxu0 %v666
    %937 = vmatprep.subr.bf16.mxu0 0
    %938 = vmatpush1.bf16.msra.mxu0 %v665
    %939 = vmatprep.subr.bf16.mxu0 0
    %940 = vmatpush2.bf16.msra.mxu0 %v680
    %941 = vmatprep.subr.bf16.mxu0 0
    %942 = vmatpush2.bf16.msra.mxu0 %v679
    %943 = vmatprep.subr.bf16.mxu0 0
    %944 = vmatpush2.bf16.msra.mxu0 %v678
    %945 = vmatprep.subr.bf16.mxu0 0
    %946 = vmatpush2.bf16.msra.mxu0 %v677
    %947 = vmatprep.subr.bf16.mxu0 0
    %948 = vmatpush2.bf16.msra.mxu0 %v676
    %949 = vmatprep.subr.bf16.mxu0 0
    %950 = vmatpush2.bf16.msra.mxu0 %v675
    %951 = vmatprep.subr.bf16.mxu0 0
    %952 = vmatpush2.bf16.msra.mxu0 %v674
    %953 = vmatprep.subr.bf16.mxu0 0
    %954 = vmatpush2.bf16.msra.mxu0 %v673
    %955 = vmatprep.mubr.bf16.mxu0 %v350
    %956 = vmatmul.mubr.bf16.gmra.mxu0 %v349
    %v957 = vpop.f32.mrf.mxu0
    %v958 = vadd.f32 %v861, %v957
    %v959 = vpop.f32.mrf.mxu0
    %v960 = vpop.f32.mrf.mxu0
    %v961 = vadd.f32 %v864, %v960
    %v962 = vpop.f32.mrf.mxu0
    %963 = vmatprep.mubr.bf16.mxu0 %v356
    %964 = vmatmul.mubr.bf16.gmra.mxu0 %v355
    %v965 = vpop.f32.mrf.mxu0
    %v966 = vadd.f32 %v869, %v965
    %v967 = vpop.f32.mrf.mxu0
    %v968 = vpop.f32.mrf.mxu0
    %v969 = vadd.f32 %v872, %v968
    %v970 = vpop.f32.mrf.mxu0
    %971 = vmatprep.mubr.bf16.mxu0 %v362
    %972 = vmatmul.mubr.bf16.gmra.mxu0 %v361
    %v973 = vpop.f32.mrf.mxu0
    %v974 = vadd.f32 %v877, %v973
    %v975 = vpop.f32.mrf.mxu0
    %v976 = vpop.f32.mrf.mxu0
    %v977 = vadd.f32 %v880, %v976
    %v978 = vpop.f32.mrf.mxu0
    %979 = vmatprep.mubr.bf16.mxu0 %v368
    %980 = vmatmul.mubr.bf16.gmra.mxu0 %v367
    %v981 = vpop.f32.mrf.mxu0
    %v982 = vadd.f32 %v885, %v981
    %v983 = vpop.f32.mrf.mxu0
    %v984 = vpop.f32.mrf.mxu0
    %v985 = vadd.f32 %v888, %v984
    %v986 = vpop.f32.mrf.mxu0
    %987 = vmatprep.mubr.bf16.mxu0 %v374
    %988 = vmatmul.mubr.bf16.gmra.mxu0 %v373
    %v989 = vpop.f32.mrf.mxu0
    %v990 = vadd.f32 %v893, %v989
    %v991 = vpop.f32.mrf.mxu0
    %v992 = vpop.f32.mrf.mxu0
    %v993 = vadd.f32 %v896, %v992
    %v994 = vpop.f32.mrf.mxu0
    %995 = vmatprep.mubr.bf16.mxu0 %v380
    %996 = vmatmul.mubr.bf16.gmra.mxu0 %v379
    %v997 = vpop.f32.mrf.mxu0
    %v998 = vadd.f32 %v901, %v997
    %v999 = vpop.f32.mrf.mxu0
    %v1000 = vpop.f32.mrf.mxu0
    %v1001 = vadd.f32 %v904, %v1000
    %v1002 = vpop.f32.mrf.mxu0
    %1003 = vmatprep.mubr.bf16.mxu0 %v386
    %1004 = vmatmul.mubr.bf16.gmra.mxu0 %v385
    %v1005 = vpop.f32.mrf.mxu0
    %v1006 = vadd.f32 %v909, %v1005
    %v1007 = vpop.f32.mrf.mxu0
    %v1008 = vpop.f32.mrf.mxu0
    %v1009 = vadd.f32 %v912, %v1008
    %v1010 = vpop.f32.mrf.mxu0
    %1011 = vmatprep.mubr.bf16.mxu0 %v392
    %1012 = vmatmul.mubr.bf16.gmra.mxu0 %v391
    %v1013 = vpop.f32.mrf.mxu0
    %v1014 = vadd.f32 %v917, %v1013
    %v1015 = vpop.f32.mrf.mxu0
    %v1016 = vpop.f32.mrf.mxu0
    %v1017 = vadd.f32 %v920, %v1016
    %v1018 = vpop.f32.mrf.mxu0
    %1019 = vdwg.mxu0
    %v1020 = vmax.f32 %v958, 0.0
    %v1021 = vmax.f32 %v961, 0.0
    %v1022 = vmax.f32 %v966, 0.0
    %v1023 = vmax.f32 %v969, 0.0
    %v1024 = vmax.f32 %v974, 0.0
    %v1025 = vmax.f32 %v977, 0.0
    %v1026 = vmax.f32 %v982, 0.0
    %v1027 = vmax.f32 %v985, 0.0
    %v1028 = vmax.f32 %v990, 0.0
    %v1029 = vmax.f32 %v993, 0.0
    %v1030 = vmax.f32 %v998, 0.0
    %v1031 = vmax.f32 %v1001, 0.0
    %v1032 = vmax.f32 %v1006, 0.0
    %v1033 = vmax.f32 %v1009, 0.0
    %v1034 = vmax.f32 %v1014, 0.0
    %v1035 = vmax.f32 %v1017, 0.0
    %v1036 = vld [vmem:[%s3] sm:$0x1]
    %v1038 = vlaneseq
    %v1039 = vshrl.u32 %v1038, 7
    %v1040 = vsub.s32 0, %v1039
    %v1041 = vrot.slane %v1036, %v1040
    %v1043 = vmul.f32 %v1020, %v1041
    %v1044 = vmul.f32 %v1021, %v1041
    %v1045 = vmul.f32 %v1022, %v1041
    %v1046 = vmul.f32 %v1023, %v1041
    %v1047 = vmul.f32 %v1024, %v1041
    %v1048 = vmul.f32 %v1025, %v1041
    %v1049 = vmul.f32 %v1026, %v1041
    %v1050 = vmul.f32 %v1027, %v1041
    %v1051 = vmul.f32 %v1028, %v1041
    %v1052 = vmul.f32 %v1029, %v1041
    %v1053 = vmul.f32 %v1030, %v1041
    %v1054 = vmul.f32 %v1031, %v1041
    %v1055 = vmul.f32 %v1032, %v1041
    %v1056 = vmul.f32 %v1033, %v1041
    %v1057 = vmul.f32 %v1034, %v1041
    %v1058 = vmul.f32 %v1035, %v1041
    %1059 = vadd.xlane.f32.xlu0 %v1043
    %v1060 = vpop.xlane.xlu0 %1059
    %1061 = vadd.xlane.f32.xlu0 %v1044
    %v1062 = vpop.xlane.xlu0 %1061
    %1063 = vadd.xlane.f32.xlu0 %v1045
    %v1064 = vpop.xlane.xlu0 %1063
    %1065 = vadd.xlane.f32.xlu0 %v1046
    %v1066 = vpop.xlane.xlu0 %1065
    %1067 = vadd.xlane.f32.xlu0 %v1047
    %v1068 = vpop.xlane.xlu0 %1067
    %1069 = vadd.xlane.f32.xlu0 %v1048
    %v1070 = vpop.xlane.xlu0 %1069
    %1071 = vadd.xlane.f32.xlu0 %v1049
    %v1072 = vpop.xlane.xlu0 %1071
    %1073 = vadd.xlane.f32.xlu0 %v1050
    %v1074 = vpop.xlane.xlu0 %1073
    %1075 = vadd.xlane.f32.xlu0 %v1051
    %v1076 = vpop.xlane.xlu0 %1075
    %1077 = vadd.xlane.f32.xlu0 %v1052
    %v1078 = vpop.xlane.xlu0 %1077
    %1079 = vadd.xlane.f32.xlu0 %v1053
    %v1080 = vpop.xlane.xlu0 %1079
    %1081 = vadd.xlane.f32.xlu0 %v1054
    %v1082 = vpop.xlane.xlu0 %1081
    %1083 = vadd.xlane.f32.xlu0 %v1055
    %v1084 = vpop.xlane.xlu0 %1083
    %1085 = vadd.xlane.f32.xlu0 %v1056
    %v1086 = vpop.xlane.xlu0 %1085
    %1087 = vadd.xlane.f32.xlu0 %v1057
    %v1088 = vpop.xlane.xlu0 %1087
    %1089 = vadd.xlane.f32.xlu0 %v1058
    %v1090 = vpop.xlane.xlu0 %1089
    %s1091 = sld [smem:[#allocation2]]
    %v1092 = vstv %s1091
    %v1093 = vadd.f32 %v1060, %v1092
    %v1094 = vadd.f32 %v1062, %v1092
    %v1095 = vadd.f32 %v1064, %v1092
    %v1096 = vadd.f32 %v1066, %v1092
    %v1097 = vadd.f32 %v1068, %v1092
    %v1098 = vadd.f32 %v1070, %v1092
    %v1099 = vadd.f32 %v1072, %v1092
    %v1100 = vadd.f32 %v1074, %v1092
    %v1101 = vadd.f32 %v1076, %v1092
    %v1102 = vadd.f32 %v1078, %v1092
    %v1103 = vadd.f32 %v1080, %v1092
    %v1104 = vadd.f32 %v1082, %v1092
    %v1105 = vadd.f32 %v1084, %v1092
    %v1106 = vadd.f32 %v1086, %v1092
    %v1107 = vadd.f32 %v1088, %v1092
    %v1108 = vadd.f32 %v1090, %v1092
    %vm1109 = vcmask 7168
    %1110 = vst.msk [vmem:[#allocation7] sm:$0xff] %vm1109, %v1093
    %1111 = vst.msk [vmem:[#allocation7 + $0x8] sm:$0xff] %vm1109, %v1094
    %1112 = vst.msk [vmem:[#allocation7 + $0x10] sm:$0xff] %vm1109, %v1095
    %1113 = vst.msk [vmem:[#allocation7 + $0x18] sm:$0xff] %vm1109, %v1096
    %1114 = vst.msk [vmem:[#allocation7 + $0x20] sm:$0xff] %vm1109, %v1097
    %1115 = vst.msk [vmem:[#allocation7 + $0x28] sm:$0xff] %vm1109, %v1098
    %1116 = vst.msk [vmem:[#allocation7 + $0x30] sm:$0xff] %vm1109, %v1099
    %1117 = vst.msk [vmem:[#allocation7 + $0x38] sm:$0xff] %vm1109, %v1100
    %1118 = vst.msk [vmem:[#allocation7 + $0x40] sm:$0xff] %vm1109, %v1101
    %1119 = vst.msk [vmem:[#allocation7 + $0x48] sm:$0xff] %vm1109, %v1102
    %1120 = vst.msk [vmem:[#allocation7 + $0x50] sm:$0xff] %vm1109, %v1103
    %1121 = vst.msk [vmem:[#allocation7 + $0x58] sm:$0xff] %vm1109, %v1104
    %1122 = vst.msk [vmem:[#allocation7 + $0x60] sm:$0xff] %vm1109, %v1105
    %1123 = vst.msk [vmem:[#allocation7 + $0x68] sm:$0xff] %vm1109, %v1106
    %1124 = vst.msk [vmem:[#allocation7 + $0x70] sm:$0xff] %vm1109, %v1107
    %1125 = vst.msk [vmem:[#allocation7 + $0x78] sm:$0xff] %vm1109, %v1108
    // Predicated region
    $region30: #{tpu_custom_call.1} parent=1 // pred_check
      _
    $region31: #{tpu_custom_call.1} parent=1 // pred_check_branch
      %1127 = sbr.rel (0) target = $region33
    $region32: #{tpu_custom_call.1} parent=1 // pred_region
      // Predicated region
      $region34: #{tpu_custom_call.1} parent=32 // pred_check
        _
      $region35: #{tpu_custom_call.1} parent=32 // pred_check_branch
        %1129 = sbr.rel (0) target = $region37
      $region36: #{tpu_custom_call.1} parent=32 // pred_region
        // Predicated region
        $region38: #{tpu_custom_call.1} parent=36 // pred_check
          _
        $region39: #{tpu_custom_call.1} parent=36 // pred_check_branch
          %1131 = sbr.rel (0) target = $region41
        $region40: #{tpu_custom_call.1} parent=36 // pred_region
          // Predicated region
          $region53: #{tpu_custom_call.1} parent=40 // pred_check
            _
          $region54: #{tpu_custom_call.1} parent=40 // pred_check_branch
            %1149 = sbr.rel (0) target = $region56
          $region55: #{tpu_custom_call.1} parent=40 // pred_region
            loop: start=0, step=1, limit=1
            $region57: #{tpu_custom_call.1} parent=55 // loop_pre_header
              _
            $region58: #{tpu_custom_call.1} parent=55 // loop_header
              %s1151 = sphi 0, %s1155
              %p1152 = scmp.ge.s32.totalorder %s1151, 1
              %s1156 = sphi [#allocation7], [#allocation7]
              %s1157 = sphi %s5, %s5
            $region59: #{tpu_custom_call.1} parent=55 // loop_header_branch
              %1154 = sbr.rel (%p1152) target = $region63
            $region60: #{tpu_custom_call.1} parent=55 // loop_body
              %v1158 = vld [vmem:[%s1156] sm:$0xff]
              %1159 = vst [vmem:[%s1157] sm:$0xff] %v1158
              %v1160 = vld [vmem:[%s1156 + $0x8] sm:$0xff]
              %1161 = vst [vmem:[%s1157 + $0x8] sm:$0xff] %v1160
            $region61: #{tpu_custom_call.1} parent=55 // loop_footer
              %s1155 = sadd.s32 1, %s1151
            $region62: #{tpu_custom_call.1} parent=55 // loop_footer_branch
              %1150 = sbr.rel target = $region58
            $region63: #{tpu_custom_call.1} parent=55 // loop_exit
              _
          $region56: #{tpu_custom_call.1} parent=40 // pred_fallthru
            _
          // Predicated region
          $region64: #{tpu_custom_call.1} parent=40 // pred_check
            _
          $region65: #{tpu_custom_call.1} parent=40 // pred_check_branch
            %1163 = sbr.rel target = $region67
          $region66: #{tpu_custom_call.1} parent=40 // pred_region
            _
          $region67: #{tpu_custom_call.1} parent=40 // pred_fallthru
            _
        $region41: #{tpu_custom_call.1} parent=36 // pred_fallthru
          _
        // Predicated region
        $region42: #{tpu_custom_call.1} parent=36 // pred_check
          _
        $region43: #{tpu_custom_call.1} parent=36 // pred_check_branch
          %1133 = sbr.rel target = $region45
        $region44: #{tpu_custom_call.1} parent=36 // pred_region
          %s1135 = ssub.s32 256, 1
          loop: start=0, step=1, limit=1
          $region46: #{tpu_custom_call.1} parent=44 // loop_pre_header
            _
          $region47: #{tpu_custom_call.1} parent=44 // loop_header
            %s1137 = sphi 0, %s1141
            %p1138 = scmp.ge.s32.totalorder %s1137, 1
            %s1142 = sphi [#allocation7], [#allocation7]
            %s1143 = sphi %s5, %s5
          $region48: #{tpu_custom_call.1} parent=44 // loop_header_branch
            %1140 = sbr.rel (%p1138) target = $region52
          $region49: #{tpu_custom_call.1} parent=44 // loop_body
            %v1144 = vld [vmem:[%s1142] sm:%s1135]
            %1145 = vst [vmem:[%s1143] sm:%s1135] %v1144
            %v1146 = vld [vmem:[%s1142 + $0x8] sm:%s1135]
            %1147 = vst [vmem:[%s1143 + $0x8] sm:%s1135] %v1146
          $region50: #{tpu_custom_call.1} parent=44 // loop_footer
            %s1141 = sadd.s32 1, %s1137
          $region51: #{tpu_custom_call.1} parent=44 // loop_footer_branch
            %1136 = sbr.rel target = $region47
          $region52: #{tpu_custom_call.1} parent=44 // loop_exit
            _
        $region45: #{tpu_custom_call.1} parent=36 // pred_fallthru
          _
      $region37: #{tpu_custom_call.1} parent=32 // pred_fallthru
        _
      %1164 = vnop
    $region33: #{tpu_custom_call.1} parent=1 // pred_fallthru
      _
    // Predicated region
    $region68: #{tpu_custom_call.1} parent=1 // pred_check
      _
    $region69: #{tpu_custom_call.1} parent=1 // pred_check_branch
      %1166 = sbr.rel (0) target = $region71
    $region70: #{tpu_custom_call.1} parent=1 // pred_region
      _
    $region71: #{tpu_custom_call.1} parent=1 // pred_fallthru
      _
    %1167 = vsyncpa [#allocation4], 1
    %1168 = vsyncpa [#allocation6], 1

</llo_original>
